<compile_context>
chip_gen: v5e
topology: v5e:2x2
jax: 0.10.0
libtpu: 0.0.40
codegen_flags: <defaults>
</compile_context>

<pallas_src>
import math

import jax
import jax.numpy as jnp
from jax.experimental import pallas as pl
from jax.experimental.pallas import tpu as pltpu

KSIZE = 7
PAD = (KSIZE - 1) // 2  # 3


def _spatial_gate_kernel(bands_ref, shifts_ref, bias_ref, x_ref, o_ref):
    # bands_ref : VMEM (7, 2, W, W) f32  banded kw-conv matrices (BN-folded weights)
    # shifts_ref: VMEM (7, H, H)    f32  0/1 row-shift matrices for the kh direction
    # bias_ref  : SMEM (1,)         f32  folded BatchNorm bias
    # x_ref     : VMEM (1, C, H, W)
    # o_ref     : VMEM (1, C, H, W)
    x = x_ref[0].astype(jnp.float32)            # (C, H, W)
    C, H, W = x.shape

    # --- ChannelPool: max and mean over channels ---
    cmax = jnp.max(x, axis=0)                   # (H, W)
    cmean = jnp.sum(x, axis=0) * (1.0 / C)      # (H, W)

    # --- 7x7 conv (2 -> 1), padding=3, entirely on the MXU ---
    def body(kh, acc):
        band = bands_ref[kh]                    # (2, W, W): kw taps as a band matrix
        partial = (
            jnp.dot(cmax, band[0], preferred_element_type=jnp.float32)
            + jnp.dot(cmean, band[1], preferred_element_type=jnp.float32)
        )                                       # (H, W)
        # kh row-shift + accumulate, also on the MXU (zero rows at the boundary)
        return acc + jnp.dot(shifts_ref[kh], partial,
                             preferred_element_type=jnp.float32)

    acc = jax.lax.fori_loop(0, KSIZE, body,
                            jnp.zeros((H, W), jnp.float32), unroll=True)

    # --- folded BatchNorm bias + sigmoid gate ---
    scale = jax.nn.sigmoid(acc + bias_ref[0])                   # (H, W)
    o_ref[0] = (x * scale[None, :, :]).astype(o_ref.dtype)


def _build_bands(w_folded, W):
    """w_folded: (2, 7, 7) BN-folded conv weights -> (7, 2, W, W) band matrices.

    bands[kh, c, i, j] = w_folded[c, kh, i - j + PAD] if 0 <= i - j + PAD < 7 else 0,
    so (plane @ bands[kh, c])[r, j] = sum_kw plane[r, j + kw - PAD] * w[c, kh, kw]
    with implicit zero padding at the W boundaries.
    """
    i = jnp.arange(W)[:, None]                 # contraction (input column) index
    j = jnp.arange(W)[None, :]                 # output column index
    kw = i - j + PAD                           # (W, W)
    valid = (kw >= 0) & (kw < KSIZE)
    g = w_folded[:, :, jnp.clip(kw, 0, KSIZE - 1)]        # (2, 7, W, W)
    bands = jnp.where(valid[None, None], g, 0.0)
    return jnp.transpose(bands, (1, 0, 2, 3)).astype(jnp.float32)


def _build_shifts(H):
    """(7, H, H) 0/1 matrices: (S[kh] @ p)[h] = p[h + kh - PAD], zero outside."""
    h = jnp.arange(H)[None, :, None]           # output row
    r = jnp.arange(H)[None, None, :]           # input (partial) row
    kh = jnp.arange(KSIZE)[:, None, None]
    return (r == h + kh - PAD).astype(jnp.float32)


def spatial_gate(x, conv_w, gamma, beta, running_mean, running_var, eps=1e-5):
    """x: (B, C, H, W).  conv_w: (1, 2, 7, 7).  BN params: shape (1,).  Eval-mode BN."""
    B, C, H, W = x.shape

    # Fold eval-mode BatchNorm (scale a, shift b) into the bias-free conv.
    a = (gamma / jnp.sqrt(running_var + eps)).astype(jnp.float32)      # (1,)
    w_folded = conv_w[0].astype(jnp.float32) * a[0]                    # (2, 7, 7)
    b_folded = (beta - running_mean * a).astype(jnp.float32)           # (1,)

    bands = _build_bands(w_folded, W)          # (7, 2, W, W)
    shifts = _build_shifts(H)                  # (7, H, H)

    elt = jnp.dtype(x.dtype).itemsize
    blk_bytes = C * H * W * elt                                       # one (1,C,H,W) block
    aux_bytes = (bands.size + shifts.size) * 4
    vmem_limit = int(min(max(4 * blk_bytes + 2 * aux_bytes + (4 << 20), 32 << 20),
                         100 << 20))

    return pl.pallas_call(
        _spatial_gate_kernel,
        out_shape=jax.ShapeDtypeStruct(x.shape, x.dtype),
        grid_spec=pltpu.PrefetchScalarGridSpec(
            num_scalar_prefetch=0,
            grid=(B,),
            in_specs=[
                pl.BlockSpec((KSIZE, 2, W, W), lambda b: (0, 0, 0, 0)),   # bands
                pl.BlockSpec((KSIZE, H, H), lambda b: (0, 0, 0)),         # shifts
                pl.BlockSpec(memory_space=pltpu.MemorySpace.SMEM),        # bias
                pl.BlockSpec((1, C, H, W), lambda b: (b, 0, 0, 0)),       # x
            ],
            out_specs=pl.BlockSpec((1, C, H, W), lambda b: (b, 0, 0, 0)),
        ),
        input_output_aliases={3: 0},   # reuse x's HBM buffer for the output
        compiler_params=pltpu.CompilerParams(
            dimension_semantics=("parallel",),
            vmem_limit_bytes=vmem_limit,
        ),
    )(bands, shifts, b_folded, x)


def _reference(x, conv_w, gamma, beta, running_mean, running_var, eps=1e-5):
    cmax = jnp.max(x, axis=1, keepdims=True)
    cmean = jnp.mean(x, axis=1, keepdims=True)
    xc = jnp.concatenate([cmax, cmean], axis=1)                 # (B, 2, H, W)
    y = jax.lax.conv_general_dilated(
        xc, conv_w, window_strides=(1, 1), padding=[(PAD, PAD), (PAD, PAD)],
        dimension_numbers=("NCHW", "OIHW", "NCHW"))
    a = gamma / jnp.sqrt(running_var + eps)
    y = y * a.reshape(1, -1, 1, 1) + (beta - running_mean * a).reshape(1, -1, 1, 1)
    return x * jax.nn.sigmoid(y)


if __name__ == "__main__":
    key = jax.random.PRNGKey(0)
    kx, kw = jax.random.split(key)

    B, C, H, W = 2, 4, 16, 16
    x = jax.random.normal(kx, (B, C, H, W), dtype=jnp.float32)

    # Deterministic conv weight init (kaiming-uniform-like, as nn.Conv2d default).
    fan_in = 2 * KSIZE * KSIZE
    bound = 1.0 / math.sqrt(fan_in)
    conv_w = jax.random.uniform(kw, (1, 2, KSIZE, KSIZE),
                                dtype=jnp.float32, minval=-bound, maxval=bound)

    # BatchNorm2d(1) default-initialized parameters/statistics (eval mode).
    gamma = jnp.ones((1,), jnp.float32)
    beta = jnp.zeros((1,), jnp.float32)
    running_mean = jnp.zeros((1,), jnp.float32)
    running_var = jnp.ones((1,), jnp.float32)

    # Reference first (the kernel aliases x's HBM buffer to its output).
    ref = jax.block_until_ready(
        _reference(x, conv_w, gamma, beta, running_mean, running_var))

    out = spatial_gate(x, conv_w, gamma, beta, running_mean, running_var)
    out = jax.block_until_ready(out)

    assert out.shape == x.shape and out.dtype == x.dtype
    err = float(jnp.max(jnp.abs(out - ref)))
    # MXU band-matmul vs XLA conv: different summation order / matmul passes.
    assert err < 2e-3, err

    print("KERNEL_OK")
</pallas_src>

<mosaic_0001>
module attributes {stable_mosaic.version = 11 : i64} {
  func.func @_spatial_gate_kernel(%arg0: i32, %arg1: memref<7x2x16x16xf32, #tpu.memory_space<vmem>>, %arg2: memref<7x16x16xf32, #tpu.memory_space<vmem>>, %arg3: memref<1xf32, #tpu.memory_space<smem>>, %arg4: memref<1x4x16x16xf32, #tpu.memory_space<vmem>>, %arg5: memref<1x4x16x16xf32, #tpu.memory_space<vmem>>) attributes {dimension_semantics = [#tpu.dimension_semantics<parallel>], iteration_bounds = array<i64: 2>, scalar_prefetch = 0 : i64, scratch_operands = 0 : i64, tpu.core_type = #tpu.core_type<tc>, window_params = [{pipeline_mode = #tpu.pipeline_mode<synchronous>, transform_indices = @transform_0, window_bounds = array<i64: 7, 2, 16, 16>}, {pipeline_mode = #tpu.pipeline_mode<synchronous>, transform_indices = @transform_1, window_bounds = array<i64: 7, 16, 16>}, {transform_indices = @transform_2, window_bounds = array<i64: 1>}, {transform_indices = @transform_3, window_bounds = array<i64: 1, 4, 16, 16>}, {transform_indices = @transform_4, window_bounds = array<i64: 1, 4, 16, 16>}]} {
    %c0 = arith.constant 0 : index
    %c0_0 = arith.constant 0 : index
    %c0_1 = arith.constant 0 : index
    %c0_2 = arith.constant 0 : index
    %0 = vector.load %arg4[%c0, %c0_0, %c0_1, %c0_2] : memref<1x4x16x16xf32, #tpu.memory_space<vmem>>, vector<1x4x16x16xf32>
    %1 = vector.shape_cast %0 : vector<1x4x16x16xf32> to vector<4x16x16xf32>
    %cst = arith.constant dense<0xFF800000> : vector<16x16xf32>
    %2 = vector.multi_reduction <maximumf>, %1, %cst [0] : vector<4x16x16xf32> to vector<16x16xf32>
    %cst_3 = arith.constant dense<0.000000e+00> : vector<16x16xf32>
    %3 = vector.multi_reduction <add>, %1, %cst_3 [0] : vector<4x16x16xf32> to vector<16x16xf32>
    %cst_4 = arith.constant 2.500000e-01 : f32
    %4 = vector.broadcast %cst_4 : f32 to vector<16x16xf32>
    %5 = arith.mulf %3, %4 : vector<16x16xf32>
    %cst_5 = arith.constant 0.000000e+00 : f32
    %6 = vector.broadcast %cst_5 : f32 to vector<16x16xf32>
    %c0_i32 = arith.constant 0 : i32
    %7 = arith.index_cast %c0_i32 : i32 to index
    %c0_6 = arith.constant 0 : index
    %c0_7 = arith.constant 0 : index
    %c0_8 = arith.constant 0 : index
    %8 = vector.load %arg1[%7, %c0_6, %c0_7, %c0_8] : memref<7x2x16x16xf32, #tpu.memory_space<vmem>>, vector<1x2x16x16xf32>
    %9 = vector.shape_cast %8 : vector<1x2x16x16xf32> to vector<2x16x16xf32>
    %10 = vector.extract_strided_slice %9 {offsets = [0, 0, 0], sizes = [1, 16, 16], strides = [1, 1, 1]} : vector<2x16x16xf32> to vector<1x16x16xf32>
    %11 = vector.shape_cast %10 : vector<1x16x16xf32> to vector<16x16xf32>
    %cst_9 = arith.constant dense<0.000000e+00> : vector<16x16xf32>
    %12 = tpu.matmul %2, %11, %cst_9 {dimension_numbers = #tpu.dot_dimension_numbers<[1], [0], [0], [1], [0, 0, 1, 1], [], []>} : vector<16x16xf32>, vector<16x16xf32>, vector<16x16xf32> -> vector<16x16xf32>
    %13 = vector.extract_strided_slice %9 {offsets = [1, 0, 0], sizes = [1, 16, 16], strides = [1, 1, 1]} : vector<2x16x16xf32> to vector<1x16x16xf32>
    %14 = vector.shape_cast %13 : vector<1x16x16xf32> to vector<16x16xf32>
    %cst_10 = arith.constant dense<0.000000e+00> : vector<16x16xf32>
    %15 = tpu.matmul %5, %14, %cst_10 {dimension_numbers = #tpu.dot_dimension_numbers<[1], [0], [0], [1], [0, 0, 1, 1], [], []>} : vector<16x16xf32>, vector<16x16xf32>, vector<16x16xf32> -> vector<16x16xf32>
    %16 = arith.addf %12, %15 : vector<16x16xf32>
    %17 = arith.index_cast %c0_i32 : i32 to index
    %c0_11 = arith.constant 0 : index
    %c0_12 = arith.constant 0 : index
    %18 = vector.load %arg2[%17, %c0_11, %c0_12] : memref<7x16x16xf32, #tpu.memory_space<vmem>>, vector<1x16x16xf32>
    %19 = vector.shape_cast %18 : vector<1x16x16xf32> to vector<16x16xf32>
    %cst_13 = arith.constant dense<0.000000e+00> : vector<16x16xf32>
    %20 = tpu.matmul %19, %16, %cst_13 {dimension_numbers = #tpu.dot_dimension_numbers<[1], [0], [0], [1], [0, 0, 1, 1], [], []>} : vector<16x16xf32>, vector<16x16xf32>, vector<16x16xf32> -> vector<16x16xf32>
    %21 = arith.addf %6, %20 : vector<16x16xf32>
    %c1_i32 = arith.constant 1 : i32
    %22 = arith.index_cast %c1_i32 : i32 to index
    %c0_14 = arith.constant 0 : index
    %c0_15 = arith.constant 0 : index
    %c0_16 = arith.constant 0 : index
    %23 = vector.load %arg1[%22, %c0_14, %c0_15, %c0_16] : memref<7x2x16x16xf32, #tpu.memory_space<vmem>>, vector<1x2x16x16xf32>
    %24 = vector.shape_cast %23 : vector<1x2x16x16xf32> to vector<2x16x16xf32>
    %25 = vector.extract_strided_slice %24 {offsets = [0, 0, 0], sizes = [1, 16, 16], strides = [1, 1, 1]} : vector<2x16x16xf32> to vector<1x16x16xf32>
    %26 = vector.shape_cast %25 : vector<1x16x16xf32> to vector<16x16xf32>
    %cst_17 = arith.constant dense<0.000000e+00> : vector<16x16xf32>
    %27 = tpu.matmul %2, %26, %cst_17 {dimension_numbers = #tpu.dot_dimension_numbers<[1], [0], [0], [1], [0, 0, 1, 1], [], []>} : vector<16x16xf32>, vector<16x16xf32>, vector<16x16xf32> -> vector<16x16xf32>
    %28 = vector.extract_strided_slice %24 {offsets = [1, 0, 0], sizes = [1, 16, 16], strides = [1, 1, 1]} : vector<2x16x16xf32> to vector<1x16x16xf32>
    %29 = vector.shape_cast %28 : vector<1x16x16xf32> to vector<16x16xf32>
    %cst_18 = arith.constant dense<0.000000e+00> : vector<16x16xf32>
    %30 = tpu.matmul %5, %29, %cst_18 {dimension_numbers = #tpu.dot_dimension_numbers<[1], [0], [0], [1], [0, 0, 1, 1], [], []>} : vector<16x16xf32>, vector<16x16xf32>, vector<16x16xf32> -> vector<16x16xf32>
    %31 = arith.addf %27, %30 : vector<16x16xf32>
    %32 = arith.index_cast %c1_i32 : i32 to index
    %c0_19 = arith.constant 0 : index
    %c0_20 = arith.constant 0 : index
    %33 = vector.load %arg2[%32, %c0_19, %c0_20] : memref<7x16x16xf32, #tpu.memory_space<vmem>>, vector<1x16x16xf32>
    %34 = vector.shape_cast %33 : vector<1x16x16xf32> to vector<16x16xf32>
    %cst_21 = arith.constant dense<0.000000e+00> : vector<16x16xf32>
    %35 = tpu.matmul %34, %31, %cst_21 {dimension_numbers = #tpu.dot_dimension_numbers<[1], [0], [0], [1], [0, 0, 1, 1], [], []>} : vector<16x16xf32>, vector<16x16xf32>, vector<16x16xf32> -> vector<16x16xf32>
    %36 = arith.addf %21, %35 : vector<16x16xf32>
    %c2_i32 = arith.constant 2 : i32
    %37 = arith.index_cast %c2_i32 : i32 to index
    %c0_22 = arith.constant 0 : index
    %c0_23 = arith.constant 0 : index
    %c0_24 = arith.constant 0 : index
    %38 = vector.load %arg1[%37, %c0_22, %c0_23, %c0_24] : memref<7x2x16x16xf32, #tpu.memory_space<vmem>>, vector<1x2x16x16xf32>
    %39 = vector.shape_cast %38 : vector<1x2x16x16xf32> to vector<2x16x16xf32>
    %40 = vector.extract_strided_slice %39 {offsets = [0, 0, 0], sizes = [1, 16, 16], strides = [1, 1, 1]} : vector<2x16x16xf32> to vector<1x16x16xf32>
    %41 = vector.shape_cast %40 : vector<1x16x16xf32> to vector<16x16xf32>
    %cst_25 = arith.constant dense<0.000000e+00> : vector<16x16xf32>
    %42 = tpu.matmul %2, %41, %cst_25 {dimension_numbers = #tpu.dot_dimension_numbers<[1], [0], [0], [1], [0, 0, 1, 1], [], []>} : vector<16x16xf32>, vector<16x16xf32>, vector<16x16xf32> -> vector<16x16xf32>
    %43 = vector.extract_strided_slice %39 {offsets = [1, 0, 0], sizes = [1, 16, 16], strides = [1, 1, 1]} : vector<2x16x16xf32> to vector<1x16x16xf32>
    %44 = vector.shape_cast %43 : vector<1x16x16xf32> to vector<16x16xf32>
    %cst_26 = arith.constant dense<0.000000e+00> : vector<16x16xf32>
    %45 = tpu.matmul %5, %44, %cst_26 {dimension_numbers = #tpu.dot_dimension_numbers<[1], [0], [0], [1], [0, 0, 1, 1], [], []>} : vector<16x16xf32>, vector<16x16xf32>, vector<16x16xf32> -> vector<16x16xf32>
    %46 = arith.addf %42, %45 : vector<16x16xf32>
    %47 = arith.index_cast %c2_i32 : i32 to index
    %c0_27 = arith.constant 0 : index
    %c0_28 = arith.constant 0 : index
    %48 = vector.load %arg2[%47, %c0_27, %c0_28] : memref<7x16x16xf32, #tpu.memory_space<vmem>>, vector<1x16x16xf32>
    %49 = vector.shape_cast %48 : vector<1x16x16xf32> to vector<16x16xf32>
    %cst_29 = arith.constant dense<0.000000e+00> : vector<16x16xf32>
    %50 = tpu.matmul %49, %46, %cst_29 {dimension_numbers = #tpu.dot_dimension_numbers<[1], [0], [0], [1], [0, 0, 1, 1], [], []>} : vector<16x16xf32>, vector<16x16xf32>, vector<16x16xf32> -> vector<16x16xf32>
    %51 = arith.addf %36, %50 : vector<16x16xf32>
    %c3_i32 = arith.constant 3 : i32
    %52 = arith.index_cast %c3_i32 : i32 to index
    %c0_30 = arith.constant 0 : index
    %c0_31 = arith.constant 0 : index
    %c0_32 = arith.constant 0 : index
    %53 = vector.load %arg1[%52, %c0_30, %c0_31, %c0_32] : memref<7x2x16x16xf32, #tpu.memory_space<vmem>>, vector<1x2x16x16xf32>
    %54 = vector.shape_cast %53 : vector<1x2x16x16xf32> to vector<2x16x16xf32>
    %55 = vector.extract_strided_slice %54 {offsets = [0, 0, 0], sizes = [1, 16, 16], strides = [1, 1, 1]} : vector<2x16x16xf32> to vector<1x16x16xf32>
    %56 = vector.shape_cast %55 : vector<1x16x16xf32> to vector<16x16xf32>
    %cst_33 = arith.constant dense<0.000000e+00> : vector<16x16xf32>
    %57 = tpu.matmul %2, %56, %cst_33 {dimension_numbers = #tpu.dot_dimension_numbers<[1], [0], [0], [1], [0, 0, 1, 1], [], []>} : vector<16x16xf32>, vector<16x16xf32>, vector<16x16xf32> -> vector<16x16xf32>
    %58 = vector.extract_strided_slice %54 {offsets = [1, 0, 0], sizes = [1, 16, 16], strides = [1, 1, 1]} : vector<2x16x16xf32> to vector<1x16x16xf32>
    %59 = vector.shape_cast %58 : vector<1x16x16xf32> to vector<16x16xf32>
    %cst_34 = arith.constant dense<0.000000e+00> : vector<16x16xf32>
    %60 = tpu.matmul %5, %59, %cst_34 {dimension_numbers = #tpu.dot_dimension_numbers<[1], [0], [0], [1], [0, 0, 1, 1], [], []>} : vector<16x16xf32>, vector<16x16xf32>, vector<16x16xf32> -> vector<16x16xf32>
    %61 = arith.addf %57, %60 : vector<16x16xf32>
    %62 = arith.index_cast %c3_i32 : i32 to index
    %c0_35 = arith.constant 0 : index
    %c0_36 = arith.constant 0 : index
    %63 = vector.load %arg2[%62, %c0_35, %c0_36] : memref<7x16x16xf32, #tpu.memory_space<vmem>>, vector<1x16x16xf32>
    %64 = vector.shape_cast %63 : vector<1x16x16xf32> to vector<16x16xf32>
    %cst_37 = arith.constant dense<0.000000e+00> : vector<16x16xf32>
    %65 = tpu.matmul %64, %61, %cst_37 {dimension_numbers = #tpu.dot_dimension_numbers<[1], [0], [0], [1], [0, 0, 1, 1], [], []>} : vector<16x16xf32>, vector<16x16xf32>, vector<16x16xf32> -> vector<16x16xf32>
    %66 = arith.addf %51, %65 : vector<16x16xf32>
    %c4_i32 = arith.constant 4 : i32
    %67 = arith.index_cast %c4_i32 : i32 to index
    %c0_38 = arith.constant 0 : index
    %c0_39 = arith.constant 0 : index
    %c0_40 = arith.constant 0 : index
    %68 = vector.load %arg1[%67, %c0_38, %c0_39, %c0_40] : memref<7x2x16x16xf32, #tpu.memory_space<vmem>>, vector<1x2x16x16xf32>
    %69 = vector.shape_cast %68 : vector<1x2x16x16xf32> to vector<2x16x16xf32>
    %70 = vector.extract_strided_slice %69 {offsets = [0, 0, 0], sizes = [1, 16, 16], strides = [1, 1, 1]} : vector<2x16x16xf32> to vector<1x16x16xf32>
    %71 = vector.shape_cast %70 : vector<1x16x16xf32> to vector<16x16xf32>
    %cst_41 = arith.constant dense<0.000000e+00> : vector<16x16xf32>
    %72 = tpu.matmul %2, %71, %cst_41 {dimension_numbers = #tpu.dot_dimension_numbers<[1], [0], [0], [1], [0, 0, 1, 1], [], []>} : vector<16x16xf32>, vector<16x16xf32>, vector<16x16xf32> -> vector<16x16xf32>
    %73 = vector.extract_strided_slice %69 {offsets = [1, 0, 0], sizes = [1, 16, 16], strides = [1, 1, 1]} : vector<2x16x16xf32> to vector<1x16x16xf32>
    %74 = vector.shape_cast %73 : vector<1x16x16xf32> to vector<16x16xf32>
    %cst_42 = arith.constant dense<0.000000e+00> : vector<16x16xf32>
    %75 = tpu.matmul %5, %74, %cst_42 {dimension_numbers = #tpu.dot_dimension_numbers<[1], [0], [0], [1], [0, 0, 1, 1], [], []>} : vector<16x16xf32>, vector<16x16xf32>, vector<16x16xf32> -> vector<16x16xf32>
    %76 = arith.addf %72, %75 : vector<16x16xf32>
    %77 = arith.index_cast %c4_i32 : i32 to index
    %c0_43 = arith.constant 0 : index
    %c0_44 = arith.constant 0 : index
    %78 = vector.load %arg2[%77, %c0_43, %c0_44] : memref<7x16x16xf32, #tpu.memory_space<vmem>>, vector<1x16x16xf32>
    %79 = vector.shape_cast %78 : vector<1x16x16xf32> to vector<16x16xf32>
    %cst_45 = arith.constant dense<0.000000e+00> : vector<16x16xf32>
    %80 = tpu.matmul %79, %76, %cst_45 {dimension_numbers = #tpu.dot_dimension_numbers<[1], [0], [0], [1], [0, 0, 1, 1], [], []>} : vector<16x16xf32>, vector<16x16xf32>, vector<16x16xf32> -> vector<16x16xf32>
    %81 = arith.addf %66, %80 : vector<16x16xf32>
    %c5_i32 = arith.constant 5 : i32
    %82 = arith.index_cast %c5_i32 : i32 to index
    %c0_46 = arith.constant 0 : index
    %c0_47 = arith.constant 0 : index
    %c0_48 = arith.constant 0 : index
    %83 = vector.load %arg1[%82, %c0_46, %c0_47, %c0_48] : memref<7x2x16x16xf32, #tpu.memory_space<vmem>>, vector<1x2x16x16xf32>
    %84 = vector.shape_cast %83 : vector<1x2x16x16xf32> to vector<2x16x16xf32>
    %85 = vector.extract_strided_slice %84 {offsets = [0, 0, 0], sizes = [1, 16, 16], strides = [1, 1, 1]} : vector<2x16x16xf32> to vector<1x16x16xf32>
    %86 = vector.shape_cast %85 : vector<1x16x16xf32> to vector<16x16xf32>
    %cst_49 = arith.constant dense<0.000000e+00> : vector<16x16xf32>
    %87 = tpu.matmul %2, %86, %cst_49 {dimension_numbers = #tpu.dot_dimension_numbers<[1], [0], [0], [1], [0, 0, 1, 1], [], []>} : vector<16x16xf32>, vector<16x16xf32>, vector<16x16xf32> -> vector<16x16xf32>
    %88 = vector.extract_strided_slice %84 {offsets = [1, 0, 0], sizes = [1, 16, 16], strides = [1, 1, 1]} : vector<2x16x16xf32> to vector<1x16x16xf32>
    %89 = vector.shape_cast %88 : vector<1x16x16xf32> to vector<16x16xf32>
    %cst_50 = arith.constant dense<0.000000e+00> : vector<16x16xf32>
    %90 = tpu.matmul %5, %89, %cst_50 {dimension_numbers = #tpu.dot_dimension_numbers<[1], [0], [0], [1], [0, 0, 1, 1], [], []>} : vector<16x16xf32>, vector<16x16xf32>, vector<16x16xf32> -> vector<16x16xf32>
    %91 = arith.addf %87, %90 : vector<16x16xf32>
    %92 = arith.index_cast %c5_i32 : i32 to index
    %c0_51 = arith.constant 0 : index
    %c0_52 = arith.constant 0 : index
    %93 = vector.load %arg2[%92, %c0_51, %c0_52] : memref<7x16x16xf32, #tpu.memory_space<vmem>>, vector<1x16x16xf32>
    %94 = vector.shape_cast %93 : vector<1x16x16xf32> to vector<16x16xf32>
    %cst_53 = arith.constant dense<0.000000e+00> : vector<16x16xf32>
    %95 = tpu.matmul %94, %91, %cst_53 {dimension_numbers = #tpu.dot_dimension_numbers<[1], [0], [0], [1], [0, 0, 1, 1], [], []>} : vector<16x16xf32>, vector<16x16xf32>, vector<16x16xf32> -> vector<16x16xf32>
    %96 = arith.addf %81, %95 : vector<16x16xf32>
    %c6_i32 = arith.constant 6 : i32
    %97 = arith.index_cast %c6_i32 : i32 to index
    %c0_54 = arith.constant 0 : index
    %c0_55 = arith.constant 0 : index
    %c0_56 = arith.constant 0 : index
    %98 = vector.load %arg1[%97, %c0_54, %c0_55, %c0_56] : memref<7x2x16x16xf32, #tpu.memory_space<vmem>>, vector<1x2x16x16xf32>
    %99 = vector.shape_cast %98 : vector<1x2x16x16xf32> to vector<2x16x16xf32>
    %100 = vector.extract_strided_slice %99 {offsets = [0, 0, 0], sizes = [1, 16, 16], strides = [1, 1, 1]} : vector<2x16x16xf32> to vector<1x16x16xf32>
    %101 = vector.shape_cast %100 : vector<1x16x16xf32> to vector<16x16xf32>
    %cst_57 = arith.constant dense<0.000000e+00> : vector<16x16xf32>
    %102 = tpu.matmul %2, %101, %cst_57 {dimension_numbers = #tpu.dot_dimension_numbers<[1], [0], [0], [1], [0, 0, 1, 1], [], []>} : vector<16x16xf32>, vector<16x16xf32>, vector<16x16xf32> -> vector<16x16xf32>
    %103 = vector.extract_strided_slice %99 {offsets = [1, 0, 0], sizes = [1, 16, 16], strides = [1, 1, 1]} : vector<2x16x16xf32> to vector<1x16x16xf32>
    %104 = vector.shape_cast %103 : vector<1x16x16xf32> to vector<16x16xf32>
    %cst_58 = arith.constant dense<0.000000e+00> : vector<16x16xf32>
    %105 = tpu.matmul %5, %104, %cst_58 {dimension_numbers = #tpu.dot_dimension_numbers<[1], [0], [0], [1], [0, 0, 1, 1], [], []>} : vector<16x16xf32>, vector<16x16xf32>, vector<16x16xf32> -> vector<16x16xf32>
    %106 = arith.addf %102, %105 : vector<16x16xf32>
    %107 = arith.index_cast %c6_i32 : i32 to index
    %c0_59 = arith.constant 0 : index
    %c0_60 = arith.constant 0 : index
    %108 = vector.load %arg2[%107, %c0_59, %c0_60] : memref<7x16x16xf32, #tpu.memory_space<vmem>>, vector<1x16x16xf32>
    %109 = vector.shape_cast %108 : vector<1x16x16xf32> to vector<16x16xf32>
    %cst_61 = arith.constant dense<0.000000e+00> : vector<16x16xf32>
    %110 = tpu.matmul %109, %106, %cst_61 {dimension_numbers = #tpu.dot_dimension_numbers<[1], [0], [0], [1], [0, 0, 1, 1], [], []>} : vector<16x16xf32>, vector<16x16xf32>, vector<16x16xf32> -> vector<16x16xf32>
    %111 = arith.addf %96, %110 : vector<16x16xf32>
    %c7_i32 = arith.constant 7 : i32
    %c0_62 = arith.constant 0 : index
    %112 = memref.load %arg3[%c0_62] : memref<1xf32, #tpu.memory_space<smem>>
    %113 = vector.broadcast %112 : f32 to vector<16x16xf32>
    %114 = arith.addf %111, %113 : vector<16x16xf32>
    %115 = arith.negf %114 : vector<16x16xf32>
    %116 = math.exp %115 : vector<16x16xf32>
    %cst_63 = arith.constant 1.000000e+00 : f32
    %117 = vector.broadcast %cst_63 : f32 to vector<16x16xf32>
    %118 = arith.addf %117, %116 : vector<16x16xf32>
    %119 = arith.divf %117, %118 : vector<16x16xf32>
    %120 = vector.shape_cast %119 : vector<16x16xf32> to vector<1x16x16xf32>
    %121 = vector.broadcast %120 : vector<1x16x16xf32> to vector<4x16x16xf32>
    %122 = arith.mulf %1, %121 : vector<4x16x16xf32>
    %c0_64 = arith.constant 0 : index
    %c0_65 = arith.constant 0 : index
    %c0_66 = arith.constant 0 : index
    %c0_67 = arith.constant 0 : index
    %123 = vector.load %arg5[%c0_64, %c0_65, %c0_66, %c0_67] : memref<1x4x16x16xf32, #tpu.memory_space<vmem>>, vector<1x4x16x16xf32>
    %124 = vector.shape_cast %123 : vector<1x4x16x16xf32> to vector<4x16x16xf32>
    %125 = vector.shape_cast %122 : vector<4x16x16xf32> to vector<1x4x16x16xf32>
    tpu.vector_store %arg5[%c0_64, %c0_65, %c0_66, %c0_67], %125 {strides = array<i32>} : memref<1x4x16x16xf32, #tpu.memory_space<vmem>>, vector<1x4x16x16xf32>,
    return
  }
  func.func @transform_0(%arg0: i32) -> (i32, i32, i32, i32) {
    %c0_i32 = arith.constant 0 : i32
    %c0_i32_0 = arith.constant 0 : i32
    %c0_i32_1 = arith.constant 0 : i32
    %c0_i32_2 = arith.constant 0 : i32
    %c0_i32_3 = arith.constant 0 : i32
    return %c0_i32, %c0_i32_0, %c0_i32_1, %c0_i32_2 : i32, i32, i32, i32
  }
  func.func @transform_1(%arg0: i32) -> (i32, i32, i32) {
    %c0_i32 = arith.constant 0 : i32
    %c0_i32_0 = arith.constant 0 : i32
    %c0_i32_1 = arith.constant 0 : i32
    %c0_i32_2 = arith.constant 0 : i32
    return %c0_i32, %c0_i32_0, %c0_i32_1 : i32, i32, i32
  }
  func.func @transform_2(%arg0: i32) -> i32 {
    %c0_i32 = arith.constant 0 : i32
    %c0_i32_0 = arith.constant 0 : i32
    return %c0_i32 : i32
  }
  func.func @transform_3(%arg0: i32) -> (i32, i32, i32, i32) {
    %c0_i32 = arith.constant 0 : i32
    %c0_i32_0 = arith.constant 0 : i32
    %c0_i32_1 = arith.constant 0 : i32
    %c0_i32_2 = arith.constant 0 : i32
    return %arg0, %c0_i32, %c0_i32_0, %c0_i32_1 : i32, i32, i32, i32
  }
  func.func @transform_4(%arg0: i32) -> (i32, i32, i32, i32) {
    %c0_i32 = arith.constant 0 : i32
    %c0_i32_0 = arith.constant 0 : i32
    %c0_i32_1 = arith.constant 0 : i32
    %c0_i32_2 = arith.constant 0 : i32
    return %arg0, %c0_i32, %c0_i32_0, %c0_i32_1 : i32, i32, i32, i32
  }
}

</mosaic_0001>

<llo_original>
// kernel: tpu_custom_call.1
$region0: #{tpu_custom_call.1}
  #allocation0 [shape = 'u32[]', space=smem, size = 0x4, offset = 0x4, fixed_abs, tag = 'smem constant byte address 0x4 - core index']
  #allocation1 [shape = 'u32[72,128]{1,0:T(1,128)}', space=vmem, size = 0x9000, scoped, tag = 'internal scratch']
  #allocation2 [shape = 'f32[1]{0:T(128)S(6)}', space=smem, size = 0x200, scoped, tag = 'scoped memory for tpu_custom_call.1']
  %s0 = inlined_call_operand.vmem [shape: f32[7,2,16,16], index: 0, kind: input, shape index: {}]
  %s1 = inlined_call_operand.hbm [shape: f32[7,16,16], index: 1, kind: input, shape index: {}]
  %s2 = inlined_call_operand.<no memory space> [shape: f32[1], index: 2, kind: input, shape index: {}]
  %s3 = inlined_call_operand.hbm [shape: f32[2,4,16,16], index: 3, kind: input, shape index: {}, may-alias: {3,4}]
  %s4 = inlined_call_operand.hbm [shape: f32[2,4,16,16], index: 4, kind: output, shape index: {}, may-alias: {3,4}]
  %s5 = sld [smem:[#allocation0]]
  $region57: #{tpu_custom_call.1} parent=0
    _
  %s7 = ssub.s32 1, %s5
  %s8 = scalar_select 0, %s7, %s5
  %9 = sst [smem:[#allocation2]] %s2
  $region1: #{tpu_custom_call.1} parent=0
    #allocation3 [shape = 'u8[57344]{0}', space=vmem, size = 0xe000, scoped, tag = 'input window, operand 1, single buffered']
    #allocation4 [shape = 's32[2]{0}', space=sflag, size = 0x8, scoped, tag = 'scoped memory for tpu_custom_call.1']
    #allocation5 [shape = 's32[2]{0}', space=sflag, size = 0x8, scoped, tag = 'scoped memory for tpu_custom_call.1']
    #allocation6 [shape = 'u8[65536]{0}', space=vmem, size = 0x10000, scoped, tag = 'input window, operand 3']
    #allocation7 [shape = 's32[2]{0}', space=sflag, size = 0x8, scoped, tag = 'scoped memory for tpu_custom_call.1']
    #allocation8 [shape = 'u8[65536]{0}', space=vmem, size = 0x10000, scoped, tag = 'output window, operand 0']
    %10 = vsyncpa [#allocation4], 0
    %11 = vsyncpa [#allocation7], 0
    %s12 = scalar_lea.sflag [#allocation7], 1
    %13 = vsyncpa %s12, 0
    %14 = vsyncpa [#allocation5], 0
    %s15 = scalar_lea.sflag [#allocation5], 1
    %16 = vsyncpa %s15, 0
    loop: start=0, step=1, limit=4
    $region2: #{tpu_custom_call.1} parent=1 // loop_pre_header
      _
    $region3: #{tpu_custom_call.1} parent=1 // loop_header
      %s18 = sphi 0, %s22
      %p19 = scmp.ge.s32.totalorder %s18, 4
      %s26 = sphi 0, %s26
      %s28 = sphi 0, %s26
      %s29 = sphi 0, %s28
      %s43 = sphi 0, %s29
      %s47 = sphi 0, %s47
      %s49 = sphi 0, %s47
      %s50 = sphi 0, %s49
      %s64 = sphi 0, %s50
      %s68 = sphi 0, %s68
      %s70 = sphi 0, %s68
      %s71 = sphi 0, %s70
      %s85 = sphi 0, %s71
      %s91 = sphi 0, %s93
      %s94 = sphi 0, %s91
      %s95 = sphi 0, %s94
      %s111 = sphi 0, %s95
      %s117 = sphi 0, %s119
      %s120 = sphi 0, %s117
      %s121 = sphi 0, %s120
      %s137 = sphi 0, %s121
    $region4: #{tpu_custom_call.1} parent=1 // loop_header_branch
      %21 = sbr.rel (%p19) target = $region8
    $region5: #{tpu_custom_call.1} parent=1 // loop_body
      %s23 = ssub.s32 %s18, 1
      %s24 = ssub.s32 %s18, 2
      %s25 = sadd.s32 %s18, 1
      %s27 = sadd.s32 %s26, 1
      %p30 = scmp.eq.s32.totalorder %s18, 1
      %p31 = scmp.ne.s32.totalorder %s26, %s28
      %p32 = scmp.eq.s32.totalorder %s18, 0
      %p33 = por %p31, %p32
      %p34 = scmp.ne.s32.totalorder %s26, %s28
      %p35 = scmp.eq.s32.totalorder %s23, 1
      %p36 = por %p34, %p35
      %p37 = scmp.ne.s32.totalorder %s28, %s29
      %p38 = scmp.eq.s32.totalorder %s23, 0
      %p39 = por %p37, %p38
      %p40 = scmp.ne.s32.totalorder %s28, %s29
      %p41 = scmp.eq.s32.totalorder %s24, 1
      %p42 = por %p40, %p41
      %p44 = scmp.ne.s32.totalorder %s29, %s43
      %p45 = scmp.eq.s32.totalorder %s24, 0
      %p46 = por %p44, %p45
      %s48 = sadd.s32 %s47, 1
      %p51 = scmp.eq.s32.totalorder %s18, 1
      %p52 = scmp.ne.s32.totalorder %s47, %s49
      %p53 = scmp.eq.s32.totalorder %s18, 0
      %p54 = por %p52, %p53
      %p55 = scmp.ne.s32.totalorder %s47, %s49
      %p56 = scmp.eq.s32.totalorder %s23, 1
      %p57 = por %p55, %p56
      %p58 = scmp.ne.s32.totalorder %s49, %s50
      %p59 = scmp.eq.s32.totalorder %s23, 0
      %p60 = por %p58, %p59
      %p61 = scmp.ne.s32.totalorder %s49, %s50
      %p62 = scmp.eq.s32.totalorder %s24, 1
      %p63 = por %p61, %p62
      %p65 = scmp.ne.s32.totalorder %s50, %s64
      %p66 = scmp.eq.s32.totalorder %s24, 0
      %p67 = por %p65, %p66
      %s69 = sadd.s32 %s68, 1
      %p72 = scmp.eq.s32.totalorder %s18, 1
      %p73 = scmp.ne.s32.totalorder %s68, %s70
      %p74 = scmp.eq.s32.totalorder %s18, 0
      %p75 = por %p73, %p74
      %p76 = scmp.ne.s32.totalorder %s68, %s70
      %p77 = scmp.eq.s32.totalorder %s23, 1
      %p78 = por %p76, %p77
      %p79 = scmp.ne.s32.totalorder %s70, %s71
      %p80 = scmp.eq.s32.totalorder %s23, 0
      %p81 = por %p79, %p80
      %p82 = scmp.ne.s32.totalorder %s70, %s71
      %p83 = scmp.eq.s32.totalorder %s24, 1
      %p84 = por %p82, %p83
      %p86 = scmp.ne.s32.totalorder %s71, %s85
      %p87 = scmp.eq.s32.totalorder %s24, 0
      %p88 = por %p86, %p87
      %s89 = ssub.s32 %s18, %s25
      %p90 = scmp.eq.s32.totalorder %s89, 0
      %s92 = sadd.s32 %s91, 1
      %s93 = scalar_select %p90, %s91, %s92
      %p96 = pneg %p90
      %p97 = scmp.eq.s32.totalorder %s18, 1
      %p98 = por %p96, %p97
      %p99 = scmp.ne.s32.totalorder %s91, %s94
      %p100 = scmp.eq.s32.totalorder %s18, 0
      %p101 = por %p99, %p100
      %p102 = scmp.ne.s32.totalorder %s91, %s94
      %p103 = scmp.eq.s32.totalorder %s23, 1
      %p104 = por %p102, %p103
      %p105 = scmp.ne.s32.totalorder %s94, %s95
      %p106 = scmp.eq.s32.totalorder %s23, 0
      %p107 = por %p105, %p106
      %p108 = scmp.ne.s32.totalorder %s94, %s95
      %p109 = scmp.eq.s32.totalorder %s24, 1
      %p110 = por %p108, %p109
      %p112 = scmp.ne.s32.totalorder %s95, %s111
      %p113 = scmp.eq.s32.totalorder %s24, 0
      %p114 = por %p112, %p113
      %s115 = ssub.s32 %s18, %s25
      %p116 = scmp.eq.s32.totalorder %s115, 0
      %s118 = sadd.s32 %s117, 1
      %s119 = scalar_select %p116, %s117, %s118
      %p122 = pneg %p116
      %p123 = scmp.eq.s32.totalorder %s18, 1
      %p124 = por %p122, %p123
      %p125 = scmp.ne.s32.totalorder %s117, %s120
      %p126 = scmp.eq.s32.totalorder %s18, 0
      %p127 = por %p125, %p126
      %p128 = scmp.ne.s32.totalorder %s117, %s120
      %p129 = scmp.eq.s32.totalorder %s23, 1
      %p130 = por %p128, %p129
      %p131 = scmp.ne.s32.totalorder %s120, %s121
      %p132 = scmp.eq.s32.totalorder %s23, 0
      %p133 = por %p131, %p132
      %p134 = scmp.ne.s32.totalorder %s120, %s121
      %p135 = scmp.eq.s32.totalorder %s24, 1
      %p136 = por %p134, %p135
      %p138 = scmp.ne.s32.totalorder %s121, %s137
      %p139 = scmp.eq.s32.totalorder %s24, 0
      %p140 = por %p138, %p139
      %p141 = scmp.le.s32.totalorder 1, %s18
      %p142 = scmp.lt.s32.totalorder %s18, 3
      %p143 = pnand %p141, %p142
      %p144 = pneg %p143
      // Predicated region
      $region9: #{tpu_custom_call.1} parent=5 // pred_check
        _
      $region10: #{tpu_custom_call.1} parent=5 // pred_check_branch
        %146 = sbr.rel (%p143) target = $region12
      $region11: #{tpu_custom_call.1} parent=5 // pred_region
        %s147 = ssub.s32 %s18, 1
        // Predicated region
        $region13: #{tpu_custom_call.1} parent=11 // pred_check
          %p148 = pneg %p39
        $region14: #{tpu_custom_call.1} parent=11 // pred_check_branch
          %150 = sbr.rel (%p148) target = $region16
        $region15: #{tpu_custom_call.1} parent=11 // pred_region
          _
        $region16: #{tpu_custom_call.1} parent=11 // pred_fallthru
          _
        // Predicated region
        $region17: #{tpu_custom_call.1} parent=11 // pred_check
          %p151 = pneg %p60
        $region18: #{tpu_custom_call.1} parent=11 // pred_check_branch
          %153 = sbr.rel (%p151) target = $region20
        $region19: #{tpu_custom_call.1} parent=11 // pred_region
          %155 = vsyncadd [#allocation4], 0
          %s156 = sshll.u32 %s1, 4
          %s157 = int_to_ptr.hbm [resolvable:$true] %s156
          %s158 = sshll.u32 [#allocation3], 4
          %s159 = int_to_ptr.vmem [resolvable:$true] %s158
          %164 = dma.hbm_to_vmem [thread:$0]  %s157, 1792, %s159, [#allocation4], 128, 128, 8
        $region20: #{tpu_custom_call.1} parent=11 // pred_fallthru
          _
        // Predicated region
        $region21: #{tpu_custom_call.1} parent=11 // pred_check
          %p165 = pneg %p81
        $region22: #{tpu_custom_call.1} parent=11 // pred_check_branch
          %167 = sbr.rel (%p165) target = $region24
        $region23: #{tpu_custom_call.1} parent=11 // pred_region
          _
        $region24: #{tpu_custom_call.1} parent=11 // pred_fallthru
          _
      $region12: #{tpu_custom_call.1} parent=5 // pred_fallthru
        _
      %p168 = scmp.lt.s32.totalorder %s18, 2
      // Predicated region
      $region25: #{tpu_custom_call.1} parent=5 // pred_check
        %p169 = pneg %p168
      $region26: #{tpu_custom_call.1} parent=5 // pred_check_branch
        %171 = sbr.rel (%p169) target = $region28
      $region27: #{tpu_custom_call.1} parent=5 // pred_region
        // Predicated region
        $region29: #{tpu_custom_call.1} parent=27 // pred_check
          %p172 = pneg %p101
        $region30: #{tpu_custom_call.1} parent=27 // pred_check_branch
          %174 = sbr.rel (%p172) target = $region32
        $region31: #{tpu_custom_call.1} parent=27 // pred_region
          %s175 = sand.u32 %s91, 1
          %s176 = scalar_lea.sflag [#allocation7], %s175
          %s177 = sand.u32 %s91, 1
          %s178 = smul.addr %s177, 64
          %s179 = scalar_lea.vmem [#allocation6], %s178
          %181 = vsyncadd %s176, 0
          %s182 = smul.addr %s18, 8
          %s183 = smul.addr %s182, 8
          %s184 = scalar_lea.hbm %s3, %s183
          %s185 = sshll.u32 %s184, 4
          %s186 = int_to_ptr.hbm [resolvable:$true] %s185
          %s187 = sshll.u32 %s179, 4
          %s188 = int_to_ptr.vmem [resolvable:$true] %s187
          %193 = dma.hbm_to_vmem [thread:$0]  %s186, 1024, %s188, %s176, 128, 128, 8
        $region32: #{tpu_custom_call.1} parent=27 // pred_fallthru
          _
      $region28: #{tpu_custom_call.1} parent=5 // pred_fallthru
        _
      %p194 = scmp.le.s32.totalorder 1, %s18
      %p195 = scmp.lt.s32.totalorder %s18, 3
      %p196 = pnand %p194, %p195
      %p197 = pneg %p196
      // Predicated region
      $region33: #{tpu_custom_call.1} parent=5 // pred_check
        _
      $region34: #{tpu_custom_call.1} parent=5 // pred_check_branch
        %199 = sbr.rel (%p196) target = $region36
      $region35: #{tpu_custom_call.1} parent=5 // pred_region
        %s200 = ssub.s32 %s18, 1
        // Predicated region
        $region37: #{tpu_custom_call.1} parent=35 // pred_check
          %p201 = pneg %p60
        $region38: #{tpu_custom_call.1} parent=35 // pred_check_branch
          %203 = sbr.rel (%p201) target = $region40
        $region39: #{tpu_custom_call.1} parent=35 // pred_region
          %205 = dma.done [#allocation4], 1792
        $region40: #{tpu_custom_call.1} parent=35 // pred_fallthru
          _
        %s206 = sand.u32 %s94, 1
        %s207 = scalar_lea.sflag [#allocation7], %s206
        %s208 = sand.u32 %s94, 1
        %s209 = smul.addr %s208, 64
        %s210 = scalar_lea.vmem [#allocation6], %s209
        // Predicated region
        $region41: #{tpu_custom_call.1} parent=35 // pred_check
          %p211 = pneg %p107
        $region42: #{tpu_custom_call.1} parent=35 // pred_check_branch
          %213 = sbr.rel (%p211) target = $region44
        $region43: #{tpu_custom_call.1} parent=35 // pred_region
          %215 = dma.done %s207, 1024
        $region44: #{tpu_custom_call.1} parent=35 // pred_fallthru
          _
        %p216 = pneg %p39
        %p217 = pneg %p36
        %p218 = pneg %p60
        %p219 = pneg %p57
        %p220 = pneg %p81
        %p221 = pneg %p78
        %s222 = sand.u32 %s94, 1
        %s223 = scalar_lea.sflag [#allocation7], %s222
        %s224 = sand.u32 %s94, 1
        %s225 = smul.addr %s224, 64
        %s226 = scalar_lea.vmem [#allocation6], %s225
        %p227 = pneg %p107
        %p228 = pneg %p104
        %p229 = pneg %p133
        %p230 = pneg %p130
        %s231 = sand.u32 %s120, 1
        %s232 = scalar_lea.sflag [#allocation5], %s231
        %s233 = sand.u32 %s120, 1
        %s234 = smul.addr %s233, 64
        %s235 = scalar_lea.vmem [#allocation8], %s234
        %v236 = vld [vmem:[%s210] sm:$0xff]
        %v237 = vld [vmem:[%s210 + $0x8] sm:$0xff]
        %v238 = vld [vmem:[%s210 + $0x10] sm:$0xff]
        %v239 = vld [vmem:[%s210 + $0x18] sm:$0xff]
        %v240 = vld [vmem:[%s210 + $0x20] sm:$0xff]
        %v241 = vld [vmem:[%s210 + $0x28] sm:$0xff]
        %v242 = vld [vmem:[%s210 + $0x30] sm:$0xff]
        %v243 = vld [vmem:[%s210 + $0x38] sm:$0xff]
        %vm244 = vcmask 130048
        %v245 = vsel %vm244, %v236, -inf
        %v246 = vsel %vm244, %v238, -inf
        %v247 = vsel %vm244, %v240, -inf
        %v248 = vmax.f32 %v245, %v247
        %v249 = vsel %vm244, %v242, -inf
        %v250 = vmax.f32 %v246, %v249
        %v251 = vmax.f32 %v248, %v250
        %v252 = vsel %vm244, %v237, -inf
        %v253 = vsel %vm244, %v239, -inf
        %v254 = vsel %vm244, %v241, -inf
        %v255 = vmax.f32 %v252, %v254
        %v256 = vsel %vm244, %v243, -inf
        %v257 = vmax.f32 %v253, %v256
        %v258 = vmax.f32 %v255, %v257
        %v259 = vsel %vm244, %v236, 0.0
        %v260 = vsel %vm244, %v238, 0.0
        %v261 = vadd.f32 %v259, %v260
        %v262 = vsel %vm244, %v240, 0.0
        %v263 = vadd.f32 %v261, %v262
        %v264 = vsel %vm244, %v242, 0.0
        %v265 = vadd.f32 %v263, %v264
        %v266 = vsel %vm244, %v237, 0.0
        %v267 = vsel %vm244, %v239, 0.0
        %v268 = vadd.f32 %v266, %v267
        %v269 = vsel %vm244, %v241, 0.0
        %v270 = vadd.f32 %v268, %v269
        %v271 = vsel %vm244, %v243, 0.0
        %v272 = vadd.f32 %v270, %v271
        %v273 = vmul.f32 %v265, 0.25
        %v274 = vmul.f32 %v272, 0.25
        %v275 = vld [vmem:[%s0] sm:$0xff]
        %v276 = vld [vmem:[%s0 + $0x8] sm:$0xff]
        %v277 = vld [vmem:[%s0 + $0x10] sm:$0xff]
        %v278 = vld [vmem:[%s0 + $0x18] sm:$0xff]
        %v280 = vsel %vm244, %v273, 0
        %v283 = vsel %vm244, %v274, 0
        %285 = vmatpush.msra.mxu0 0.0
        %286 = vmatpush.msra.mxu0 0.0
        %287 = vmatpush.msra.mxu0 0.0
        %288 = vmatpush.msra.mxu0 0.0
        %289 = vmatpush.msra.mxu0 0.0
        %290 = vmatpush.msra.mxu0 0.0
        %291 = vmatpush.msra.mxu0 0.0
        %292 = vmatpush.msra.mxu0 0.0
        %293 = vmatpush.msra.mxu0 0.0
        %294 = vmatpush.msra.mxu0 0.0
        %295 = vmatpush.msra.mxu0 0.0
        %296 = vmatpush.msra.mxu0 0.0
        %297 = vmatpush.msra.mxu0 0.0
        %298 = vmatpush.msra.mxu0 0.0
        %299 = vmatpush.msra.mxu0 %v278
        %300 = vmatpush.msra.mxu0 %v277
        %301 = vmatmul.f32.gmra.mxu0 %v280
        %v302 = vpop.f32.mrf.mxu0
        %v303 = vadd.f32 0.0, %v302
        %304 = vmatmul.f32.gmra.mxu0 %v283
        %v305 = vpop.f32.mrf.mxu0
        %v306 = vadd.f32 0.0, %v305
        %307 = vdwg.mxu0
        %v309 = vsel %vm244, %v251, 0
        %v312 = vsel %vm244, %v258, 0
        %314 = vmatpush.msra.mxu0 0.0
        %315 = vmatpush.msra.mxu0 0.0
        %316 = vmatpush.msra.mxu0 0.0
        %317 = vmatpush.msra.mxu0 0.0
        %318 = vmatpush.msra.mxu0 0.0
        %319 = vmatpush.msra.mxu0 0.0
        %320 = vmatpush.msra.mxu0 0.0
        %321 = vmatpush.msra.mxu0 0.0
        %322 = vmatpush.msra.mxu0 0.0
        %323 = vmatpush.msra.mxu0 0.0
        %324 = vmatpush.msra.mxu0 0.0
        %325 = vmatpush.msra.mxu0 0.0
        %326 = vmatpush.msra.mxu0 0.0
        %327 = vmatpush.msra.mxu0 0.0
        %328 = vmatpush.msra.mxu0 %v276
        %329 = vmatpush.msra.mxu0 %v275
        %330 = vmatmul.f32.gmra.mxu0 %v309
        %v331 = vpop.f32.mrf.mxu0
        %v332 = vadd.f32 %v303, %v331
        %333 = vmatmul.f32.gmra.mxu0 %v312
        %v334 = vpop.f32.mrf.mxu0
        %v335 = vadd.f32 %v306, %v334
        %336 = vdwg.mxu0
        %v337 = vld [vmem:[#allocation3] sm:$0xff]
        %v338 = vld [vmem:[#allocation3 + $0x8] sm:$0xff]
        %s339 = scalar_lea.vmem %s0, 32
        %v340 = vld [vmem:[%s339] sm:$0xff]
        %v341 = vld [vmem:[%s339 + $0x8] sm:$0xff]
        %v342 = vld [vmem:[%s339 + $0x10] sm:$0xff]
        %v343 = vld [vmem:[%s339 + $0x18] sm:$0xff]
        %344 = vmatpush.msra.mxu0 0.0
        %345 = vmatpush.msra.mxu0 0.0
        %346 = vmatpush.msra.mxu0 0.0
        %347 = vmatpush.msra.mxu0 0.0
        %348 = vmatpush.msra.mxu0 0.0
        %349 = vmatpush.msra.mxu0 0.0
        %350 = vmatpush.msra.mxu0 0.0
        %351 = vmatpush.msra.mxu0 0.0
        %352 = vmatpush.msra.mxu0 0.0
        %353 = vmatpush.msra.mxu0 0.0
        %354 = vmatpush.msra.mxu0 0.0
        %355 = vmatpush.msra.mxu0 0.0
        %356 = vmatpush.msra.mxu0 0.0
        %357 = vmatpush.msra.mxu0 0.0
        %358 = vmatpush.msra.mxu0 %v343
        %359 = vmatpush.msra.mxu0 %v342
        %360 = vmatmul.f32.gmra.mxu0 %v280
        %v361 = vpop.f32.mrf.mxu0
        %v362 = vadd.f32 0.0, %v361
        %363 = vmatmul.f32.gmra.mxu0 %v283
        %v364 = vpop.f32.mrf.mxu0
        %v365 = vadd.f32 0.0, %v364
        %366 = vdwg.mxu0
        %367 = vmatpush.msra.mxu0 0.0
        %368 = vmatpush.msra.mxu0 0.0
        %369 = vmatpush.msra.mxu0 0.0
        %370 = vmatpush.msra.mxu0 0.0
        %371 = vmatpush.msra.mxu0 0.0
        %372 = vmatpush.msra.mxu0 0.0
        %373 = vmatpush.msra.mxu0 0.0
        %374 = vmatpush.msra.mxu0 0.0
        %375 = vmatpush.msra.mxu0 0.0
        %376 = vmatpush.msra.mxu0 0.0
        %377 = vmatpush.msra.mxu0 0.0
        %378 = vmatpush.msra.mxu0 0.0
        %379 = vmatpush.msra.mxu0 0.0
        %380 = vmatpush.msra.mxu0 0.0
        %381 = vmatpush.msra.mxu0 %v341
        %382 = vmatpush.msra.mxu0 %v340
        %383 = vmatmul.f32.gmra.mxu0 %v309
        %v384 = vpop.f32.mrf.mxu0
        %v385 = vadd.f32 %v362, %v384
        %386 = vmatmul.f32.gmra.mxu0 %v312
        %v387 = vpop.f32.mrf.mxu0
        %v388 = vadd.f32 %v365, %v387
        %389 = vdwg.mxu0
        %s390 = scalar_lea.vmem [#allocation3], 16
        %v391 = vld [vmem:[%s390] sm:$0xff]
        %v392 = vld [vmem:[%s390 + $0x8] sm:$0xff]
        %v394 = vsel %vm244, %v391, 0
        %v397 = vsel %vm244, %v392, 0
        %399 = vmatpush.msra.mxu0 0.0
        %400 = vmatpush.msra.mxu0 0.0
        %401 = vmatpush.msra.mxu0 0.0
        %402 = vmatpush.msra.mxu0 0.0
        %403 = vmatpush.msra.mxu0 0.0
        %404 = vmatpush.msra.mxu0 0.0
        %405 = vmatpush.msra.mxu0 0.0
        %406 = vmatpush.msra.mxu0 0.0
        %407 = vmatpush.msra.mxu0 0.0
        %408 = vmatpush.msra.mxu0 0.0
        %409 = vmatpush.msra.mxu0 0.0
        %410 = vmatpush.msra.mxu0 0.0
        %411 = vmatpush.msra.mxu0 0.0
        %412 = vmatpush.msra.mxu0 0.0
        %413 = vmatpush.msra.mxu0 %v388
        %414 = vmatpush.msra.mxu0 %v385
        %415 = vmatmul.f32.gmra.mxu0 %v394
        %v416 = vpop.f32.mrf.mxu0
        %v417 = vadd.f32 0.0, %v416
        %418 = vmatmul.f32.gmra.mxu0 %v397
        %v419 = vpop.f32.mrf.mxu0
        %v420 = vadd.f32 0.0, %v419
        %421 = vdwg.mxu0
        %v423 = vsel %vm244, %v337, 0
        %v426 = vsel %vm244, %v338, 0
        %428 = vmatpush.msra.mxu0 0.0
        %429 = vmatpush.msra.mxu0 0.0
        %430 = vmatpush.msra.mxu0 0.0
        %431 = vmatpush.msra.mxu0 0.0
        %432 = vmatpush.msra.mxu0 0.0
        %433 = vmatpush.msra.mxu0 0.0
        %434 = vmatpush.msra.mxu0 0.0
        %435 = vmatpush.msra.mxu0 0.0
        %436 = vmatpush.msra.mxu0 0.0
        %437 = vmatpush.msra.mxu0 0.0
        %438 = vmatpush.msra.mxu0 0.0
        %439 = vmatpush.msra.mxu0 0.0
        %440 = vmatpush.msra.mxu0 0.0
        %441 = vmatpush.msra.mxu0 0.0
        %442 = vmatpush.msra.mxu0 %v335
        %443 = vmatpush.msra.mxu0 %v332
        %444 = vmatmul.f32.gmra.mxu0 %v423
        %v445 = vpop.f32.mrf.mxu0
        %v446 = vadd.f32 %v417, %v445
        %447 = vmatmul.f32.gmra.mxu0 %v426
        %v448 = vpop.f32.mrf.mxu0
        %v449 = vadd.f32 %v420, %v448
        %450 = vdwg.mxu0
        %s451 = scalar_lea.vmem %s0, 64
        %v452 = vld [vmem:[%s451] sm:$0xff]
        %v453 = vld [vmem:[%s451 + $0x8] sm:$0xff]
        %v454 = vld [vmem:[%s451 + $0x10] sm:$0xff]
        %v455 = vld [vmem:[%s451 + $0x18] sm:$0xff]
        %456 = vmatpush.msra.mxu0 0.0
        %457 = vmatpush.msra.mxu0 0.0
        %458 = vmatpush.msra.mxu0 0.0
        %459 = vmatpush.msra.mxu0 0.0
        %460 = vmatpush.msra.mxu0 0.0
        %461 = vmatpush.msra.mxu0 0.0
        %462 = vmatpush.msra.mxu0 0.0
        %463 = vmatpush.msra.mxu0 0.0
        %464 = vmatpush.msra.mxu0 0.0
        %465 = vmatpush.msra.mxu0 0.0
        %466 = vmatpush.msra.mxu0 0.0
        %467 = vmatpush.msra.mxu0 0.0
        %468 = vmatpush.msra.mxu0 0.0
        %469 = vmatpush.msra.mxu0 0.0
        %470 = vmatpush.msra.mxu0 %v455
        %471 = vmatpush.msra.mxu0 %v454
        %472 = vmatmul.f32.gmra.mxu0 %v280
        %v473 = vpop.f32.mrf.mxu0
        %v474 = vadd.f32 0.0, %v473
        %475 = vmatmul.f32.gmra.mxu0 %v283
        %v476 = vpop.f32.mrf.mxu0
        %v477 = vadd.f32 0.0, %v476
        %478 = vdwg.mxu0
        %479 = vmatpush.msra.mxu0 0.0
        %480 = vmatpush.msra.mxu0 0.0
        %481 = vmatpush.msra.mxu0 0.0
        %482 = vmatpush.msra.mxu0 0.0
        %483 = vmatpush.msra.mxu0 0.0
        %484 = vmatpush.msra.mxu0 0.0
        %485 = vmatpush.msra.mxu0 0.0
        %486 = vmatpush.msra.mxu0 0.0
        %487 = vmatpush.msra.mxu0 0.0
        %488 = vmatpush.msra.mxu0 0.0
        %489 = vmatpush.msra.mxu0 0.0
        %490 = vmatpush.msra.mxu0 0.0
        %491 = vmatpush.msra.mxu0 0.0
        %492 = vmatpush.msra.mxu0 0.0
        %493 = vmatpush.msra.mxu0 %v453
        %494 = vmatpush.msra.mxu0 %v452
        %495 = vmatmul.f32.gmra.mxu0 %v309
        %v496 = vpop.f32.mrf.mxu0
        %v497 = vadd.f32 %v474, %v496
        %498 = vmatmul.f32.gmra.mxu0 %v312
        %v499 = vpop.f32.mrf.mxu0
        %v500 = vadd.f32 %v477, %v499
        %501 = vdwg.mxu0
        %s502 = scalar_lea.vmem [#allocation3], 32
        %v503 = vld [vmem:[%s502] sm:$0xff]
        %v504 = vld [vmem:[%s502 + $0x8] sm:$0xff]
        %v506 = vsel %vm244, %v503, 0
        %v509 = vsel %vm244, %v504, 0
        %511 = vmatpush.msra.mxu0 0.0
        %512 = vmatpush.msra.mxu0 0.0
        %513 = vmatpush.msra.mxu0 0.0
        %514 = vmatpush.msra.mxu0 0.0
        %515 = vmatpush.msra.mxu0 0.0
        %516 = vmatpush.msra.mxu0 0.0
        %517 = vmatpush.msra.mxu0 0.0
        %518 = vmatpush.msra.mxu0 0.0
        %519 = vmatpush.msra.mxu0 0.0
        %520 = vmatpush.msra.mxu0 0.0
        %521 = vmatpush.msra.mxu0 0.0
        %522 = vmatpush.msra.mxu0 0.0
        %523 = vmatpush.msra.mxu0 0.0
        %524 = vmatpush.msra.mxu0 0.0
        %525 = vmatpush.msra.mxu0 %v500
        %526 = vmatpush.msra.mxu0 %v497
        %527 = vmatmul.f32.gmra.mxu0 %v506
        %v528 = vpop.f32.mrf.mxu0
        %v529 = vadd.f32 0.0, %v528
        %530 = vmatmul.f32.gmra.mxu0 %v509
        %v531 = vpop.f32.mrf.mxu0
        %v532 = vadd.f32 0.0, %v531
        %533 = vdwg.mxu0
        %v534 = vadd.f32 %v446, %v529
        %v535 = vadd.f32 %v449, %v532
        %s536 = scalar_lea.vmem %s0, 96
        %v537 = vld [vmem:[%s536] sm:$0xff]
        %v538 = vld [vmem:[%s536 + $0x8] sm:$0xff]
        %v539 = vld [vmem:[%s536 + $0x10] sm:$0xff]
        %v540 = vld [vmem:[%s536 + $0x18] sm:$0xff]
        %541 = vmatpush.msra.mxu0 0.0
        %542 = vmatpush.msra.mxu0 0.0
        %543 = vmatpush.msra.mxu0 0.0
        %544 = vmatpush.msra.mxu0 0.0
        %545 = vmatpush.msra.mxu0 0.0
        %546 = vmatpush.msra.mxu0 0.0
        %547 = vmatpush.msra.mxu0 0.0
        %548 = vmatpush.msra.mxu0 0.0
        %549 = vmatpush.msra.mxu0 0.0
        %550 = vmatpush.msra.mxu0 0.0
        %551 = vmatpush.msra.mxu0 0.0
        %552 = vmatpush.msra.mxu0 0.0
        %553 = vmatpush.msra.mxu0 0.0
        %554 = vmatpush.msra.mxu0 0.0
        %555 = vmatpush.msra.mxu0 %v540
        %556 = vmatpush.msra.mxu0 %v539
        %557 = vmatmul.f32.gmra.mxu0 %v280
        %v558 = vpop.f32.mrf.mxu0
        %v559 = vadd.f32 0.0, %v558
        %560 = vmatmul.f32.gmra.mxu0 %v283
        %v561 = vpop.f32.mrf.mxu0
        %v562 = vadd.f32 0.0, %v561
        %563 = vdwg.mxu0
        %564 = vmatpush.msra.mxu0 0.0
        %565 = vmatpush.msra.mxu0 0.0
        %566 = vmatpush.msra.mxu0 0.0
        %567 = vmatpush.msra.mxu0 0.0
        %568 = vmatpush.msra.mxu0 0.0
        %569 = vmatpush.msra.mxu0 0.0
        %570 = vmatpush.msra.mxu0 0.0
        %571 = vmatpush.msra.mxu0 0.0
        %572 = vmatpush.msra.mxu0 0.0
        %573 = vmatpush.msra.mxu0 0.0
        %574 = vmatpush.msra.mxu0 0.0
        %575 = vmatpush.msra.mxu0 0.0
        %576 = vmatpush.msra.mxu0 0.0
        %577 = vmatpush.msra.mxu0 0.0
        %578 = vmatpush.msra.mxu0 %v538
        %579 = vmatpush.msra.mxu0 %v537
        %580 = vmatmul.f32.gmra.mxu0 %v309
        %v581 = vpop.f32.mrf.mxu0
        %v582 = vadd.f32 %v559, %v581
        %583 = vmatmul.f32.gmra.mxu0 %v312
        %v584 = vpop.f32.mrf.mxu0
        %v585 = vadd.f32 %v562, %v584
        %586 = vdwg.mxu0
        %s587 = scalar_lea.vmem [#allocation3], 48
        %v588 = vld [vmem:[%s587] sm:$0xff]
        %v589 = vld [vmem:[%s587 + $0x8] sm:$0xff]
        %v591 = vsel %vm244, %v588, 0
        %v594 = vsel %vm244, %v589, 0
        %596 = vmatpush.msra.mxu0 0.0
        %597 = vmatpush.msra.mxu0 0.0
        %598 = vmatpush.msra.mxu0 0.0
        %599 = vmatpush.msra.mxu0 0.0
        %600 = vmatpush.msra.mxu0 0.0
        %601 = vmatpush.msra.mxu0 0.0
        %602 = vmatpush.msra.mxu0 0.0
        %603 = vmatpush.msra.mxu0 0.0
        %604 = vmatpush.msra.mxu0 0.0
        %605 = vmatpush.msra.mxu0 0.0
        %606 = vmatpush.msra.mxu0 0.0
        %607 = vmatpush.msra.mxu0 0.0
        %608 = vmatpush.msra.mxu0 0.0
        %609 = vmatpush.msra.mxu0 0.0
        %610 = vmatpush.msra.mxu0 %v585
        %611 = vmatpush.msra.mxu0 %v582
        %612 = vmatmul.f32.gmra.mxu0 %v591
        %v613 = vpop.f32.mrf.mxu0
        %v614 = vadd.f32 0.0, %v613
        %615 = vmatmul.f32.gmra.mxu0 %v594
        %v616 = vpop.f32.mrf.mxu0
        %v617 = vadd.f32 0.0, %v616
        %618 = vdwg.mxu0
        %v619 = vadd.f32 %v534, %v614
        %v620 = vadd.f32 %v535, %v617
        %s621 = scalar_lea.vmem %s0, 128
        %v622 = vld [vmem:[%s621] sm:$0xff]
        %v623 = vld [vmem:[%s621 + $0x8] sm:$0xff]
        %v624 = vld [vmem:[%s621 + $0x10] sm:$0xff]
        %v625 = vld [vmem:[%s621 + $0x18] sm:$0xff]
        %626 = vmatpush.msra.mxu0 0.0
        %627 = vmatpush.msra.mxu0 0.0
        %628 = vmatpush.msra.mxu0 0.0
        %629 = vmatpush.msra.mxu0 0.0
        %630 = vmatpush.msra.mxu0 0.0
        %631 = vmatpush.msra.mxu0 0.0
        %632 = vmatpush.msra.mxu0 0.0
        %633 = vmatpush.msra.mxu0 0.0
        %634 = vmatpush.msra.mxu0 0.0
        %635 = vmatpush.msra.mxu0 0.0
        %636 = vmatpush.msra.mxu0 0.0
        %637 = vmatpush.msra.mxu0 0.0
        %638 = vmatpush.msra.mxu0 0.0
        %639 = vmatpush.msra.mxu0 0.0
        %640 = vmatpush.msra.mxu0 %v625
        %641 = vmatpush.msra.mxu0 %v624
        %642 = vmatmul.f32.gmra.mxu0 %v280
        %v643 = vpop.f32.mrf.mxu0
        %v644 = vadd.f32 0.0, %v643
        %645 = vmatmul.f32.gmra.mxu0 %v283
        %v646 = vpop.f32.mrf.mxu0
        %v647 = vadd.f32 0.0, %v646
        %648 = vdwg.mxu0
        %649 = vmatpush.msra.mxu0 0.0
        %650 = vmatpush.msra.mxu0 0.0
        %651 = vmatpush.msra.mxu0 0.0
        %652 = vmatpush.msra.mxu0 0.0
        %653 = vmatpush.msra.mxu0 0.0
        %654 = vmatpush.msra.mxu0 0.0
        %655 = vmatpush.msra.mxu0 0.0
        %656 = vmatpush.msra.mxu0 0.0
        %657 = vmatpush.msra.mxu0 0.0
        %658 = vmatpush.msra.mxu0 0.0
        %659 = vmatpush.msra.mxu0 0.0
        %660 = vmatpush.msra.mxu0 0.0
        %661 = vmatpush.msra.mxu0 0.0
        %662 = vmatpush.msra.mxu0 0.0
        %663 = vmatpush.msra.mxu0 %v623
        %664 = vmatpush.msra.mxu0 %v622
        %665 = vmatmul.f32.gmra.mxu0 %v309
        %v666 = vpop.f32.mrf.mxu0
        %v667 = vadd.f32 %v644, %v666
        %668 = vmatmul.f32.gmra.mxu0 %v312
        %v669 = vpop.f32.mrf.mxu0
        %v670 = vadd.f32 %v647, %v669
        %671 = vdwg.mxu0
        %s672 = scalar_lea.vmem [#allocation3], 64
        %v673 = vld [vmem:[%s672] sm:$0xff]
        %v674 = vld [vmem:[%s672 + $0x8] sm:$0xff]
        %v676 = vsel %vm244, %v673, 0
        %v679 = vsel %vm244, %v674, 0
        %681 = vmatpush.msra.mxu0 0.0
        %682 = vmatpush.msra.mxu0 0.0
        %683 = vmatpush.msra.mxu0 0.0
        %684 = vmatpush.msra.mxu0 0.0
        %685 = vmatpush.msra.mxu0 0.0
        %686 = vmatpush.msra.mxu0 0.0
        %687 = vmatpush.msra.mxu0 0.0
        %688 = vmatpush.msra.mxu0 0.0
        %689 = vmatpush.msra.mxu0 0.0
        %690 = vmatpush.msra.mxu0 0.0
        %691 = vmatpush.msra.mxu0 0.0
        %692 = vmatpush.msra.mxu0 0.0
        %693 = vmatpush.msra.mxu0 0.0
        %694 = vmatpush.msra.mxu0 0.0
        %695 = vmatpush.msra.mxu0 %v670
        %696 = vmatpush.msra.mxu0 %v667
        %697 = vmatmul.f32.gmra.mxu0 %v676
        %v698 = vpop.f32.mrf.mxu0
        %v699 = vadd.f32 0.0, %v698
        %700 = vmatmul.f32.gmra.mxu0 %v679
        %v701 = vpop.f32.mrf.mxu0
        %v702 = vadd.f32 0.0, %v701
        %703 = vdwg.mxu0
        %v704 = vadd.f32 %v619, %v699
        %v705 = vadd.f32 %v620, %v702
        %s706 = scalar_lea.vmem %s0, 160
        %v707 = vld [vmem:[%s706] sm:$0xff]
        %v708 = vld [vmem:[%s706 + $0x8] sm:$0xff]
        %v709 = vld [vmem:[%s706 + $0x10] sm:$0xff]
        %v710 = vld [vmem:[%s706 + $0x18] sm:$0xff]
        %711 = vmatpush.msra.mxu0 0.0
        %712 = vmatpush.msra.mxu0 0.0
        %713 = vmatpush.msra.mxu0 0.0
        %714 = vmatpush.msra.mxu0 0.0
        %715 = vmatpush.msra.mxu0 0.0
        %716 = vmatpush.msra.mxu0 0.0
        %717 = vmatpush.msra.mxu0 0.0
        %718 = vmatpush.msra.mxu0 0.0
        %719 = vmatpush.msra.mxu0 0.0
        %720 = vmatpush.msra.mxu0 0.0
        %721 = vmatpush.msra.mxu0 0.0
        %722 = vmatpush.msra.mxu0 0.0
        %723 = vmatpush.msra.mxu0 0.0
        %724 = vmatpush.msra.mxu0 0.0
        %725 = vmatpush.msra.mxu0 %v710
        %726 = vmatpush.msra.mxu0 %v709
        %727 = vmatmul.f32.gmra.mxu0 %v280
        %v728 = vpop.f32.mrf.mxu0
        %v729 = vadd.f32 0.0, %v728
        %730 = vmatmul.f32.gmra.mxu0 %v283
        %v731 = vpop.f32.mrf.mxu0
        %v732 = vadd.f32 0.0, %v731
        %733 = vdwg.mxu0
        %734 = vmatpush.msra.mxu0 0.0
        %735 = vmatpush.msra.mxu0 0.0
        %736 = vmatpush.msra.mxu0 0.0
        %737 = vmatpush.msra.mxu0 0.0
        %738 = vmatpush.msra.mxu0 0.0
        %739 = vmatpush.msra.mxu0 0.0
        %740 = vmatpush.msra.mxu0 0.0
        %741 = vmatpush.msra.mxu0 0.0
        %742 = vmatpush.msra.mxu0 0.0
        %743 = vmatpush.msra.mxu0 0.0
        %744 = vmatpush.msra.mxu0 0.0
        %745 = vmatpush.msra.mxu0 0.0
        %746 = vmatpush.msra.mxu0 0.0
        %747 = vmatpush.msra.mxu0 0.0
        %748 = vmatpush.msra.mxu0 %v708
        %749 = vmatpush.msra.mxu0 %v707
        %750 = vmatmul.f32.gmra.mxu0 %v309
        %v751 = vpop.f32.mrf.mxu0
        %v752 = vadd.f32 %v729, %v751
        %753 = vmatmul.f32.gmra.mxu0 %v312
        %v754 = vpop.f32.mrf.mxu0
        %v755 = vadd.f32 %v732, %v754
        %756 = vdwg.mxu0
        %s757 = scalar_lea.vmem [#allocation3], 80
        %v758 = vld [vmem:[%s757] sm:$0xff]
        %v759 = vld [vmem:[%s757 + $0x8] sm:$0xff]
        %v761 = vsel %vm244, %v758, 0
        %v764 = vsel %vm244, %v759, 0
        %766 = vmatpush.msra.mxu0 0.0
        %767 = vmatpush.msra.mxu0 0.0
        %768 = vmatpush.msra.mxu0 0.0
        %769 = vmatpush.msra.mxu0 0.0
        %770 = vmatpush.msra.mxu0 0.0
        %771 = vmatpush.msra.mxu0 0.0
        %772 = vmatpush.msra.mxu0 0.0
        %773 = vmatpush.msra.mxu0 0.0
        %774 = vmatpush.msra.mxu0 0.0
        %775 = vmatpush.msra.mxu0 0.0
        %776 = vmatpush.msra.mxu0 0.0
        %777 = vmatpush.msra.mxu0 0.0
        %778 = vmatpush.msra.mxu0 0.0
        %779 = vmatpush.msra.mxu0 0.0
        %780 = vmatpush.msra.mxu0 %v755
        %781 = vmatpush.msra.mxu0 %v752
        %782 = vmatmul.f32.gmra.mxu0 %v761
        %v783 = vpop.f32.mrf.mxu0
        %v784 = vadd.f32 0.0, %v783
        %785 = vmatmul.f32.gmra.mxu0 %v764
        %v786 = vpop.f32.mrf.mxu0
        %v787 = vadd.f32 0.0, %v786
        %788 = vdwg.mxu0
        %v789 = vadd.f32 %v704, %v784
        %v790 = vadd.f32 %v705, %v787
        %s791 = scalar_lea.vmem %s0, 192
        %v792 = vld [vmem:[%s791] sm:$0xff]
        %v793 = vld [vmem:[%s791 + $0x8] sm:$0xff]
        %v794 = vld [vmem:[%s791 + $0x10] sm:$0xff]
        %v795 = vld [vmem:[%s791 + $0x18] sm:$0xff]
        %796 = vmatpush.msra.mxu0 0.0
        %797 = vmatpush.msra.mxu0 0.0
        %798 = vmatpush.msra.mxu0 0.0
        %799 = vmatpush.msra.mxu0 0.0
        %800 = vmatpush.msra.mxu0 0.0
        %801 = vmatpush.msra.mxu0 0.0
        %802 = vmatpush.msra.mxu0 0.0
        %803 = vmatpush.msra.mxu0 0.0
        %804 = vmatpush.msra.mxu0 0.0
        %805 = vmatpush.msra.mxu0 0.0
        %806 = vmatpush.msra.mxu0 0.0
        %807 = vmatpush.msra.mxu0 0.0
        %808 = vmatpush.msra.mxu0 0.0
        %809 = vmatpush.msra.mxu0 0.0
        %810 = vmatpush.msra.mxu0 %v795
        %811 = vmatpush.msra.mxu0 %v794
        %812 = vmatmul.f32.gmra.mxu0 %v280
        %v813 = vpop.f32.mrf.mxu0
        %v814 = vadd.f32 0.0, %v813
        %815 = vmatmul.f32.gmra.mxu0 %v283
        %v816 = vpop.f32.mrf.mxu0
        %v817 = vadd.f32 0.0, %v816
        %818 = vdwg.mxu0
        %819 = vmatpush.msra.mxu0 0.0
        %820 = vmatpush.msra.mxu0 0.0
        %821 = vmatpush.msra.mxu0 0.0
        %822 = vmatpush.msra.mxu0 0.0
        %823 = vmatpush.msra.mxu0 0.0
        %824 = vmatpush.msra.mxu0 0.0
        %825 = vmatpush.msra.mxu0 0.0
        %826 = vmatpush.msra.mxu0 0.0
        %827 = vmatpush.msra.mxu0 0.0
        %828 = vmatpush.msra.mxu0 0.0
        %829 = vmatpush.msra.mxu0 0.0
        %830 = vmatpush.msra.mxu0 0.0
        %831 = vmatpush.msra.mxu0 0.0
        %832 = vmatpush.msra.mxu0 0.0
        %833 = vmatpush.msra.mxu0 %v793
        %834 = vmatpush.msra.mxu0 %v792
        %835 = vmatmul.f32.gmra.mxu0 %v309
        %v836 = vpop.f32.mrf.mxu0
        %v837 = vadd.f32 %v814, %v836
        %838 = vmatmul.f32.gmra.mxu0 %v312
        %v839 = vpop.f32.mrf.mxu0
        %v840 = vadd.f32 %v817, %v839
        %841 = vdwg.mxu0
        %s842 = scalar_lea.vmem [#allocation3], 96
        %v843 = vld [vmem:[%s842] sm:$0xff]
        %v844 = vld [vmem:[%s842 + $0x8] sm:$0xff]
        %v846 = vsel %vm244, %v843, 0
        %v849 = vsel %vm244, %v844, 0
        %851 = vmatpush.msra.mxu0 0.0
        %852 = vmatpush.msra.mxu0 0.0
        %853 = vmatpush.msra.mxu0 0.0
        %854 = vmatpush.msra.mxu0 0.0
        %855 = vmatpush.msra.mxu0 0.0
        %856 = vmatpush.msra.mxu0 0.0
        %857 = vmatpush.msra.mxu0 0.0
        %858 = vmatpush.msra.mxu0 0.0
        %859 = vmatpush.msra.mxu0 0.0
        %860 = vmatpush.msra.mxu0 0.0
        %861 = vmatpush.msra.mxu0 0.0
        %862 = vmatpush.msra.mxu0 0.0
        %863 = vmatpush.msra.mxu0 0.0
        %864 = vmatpush.msra.mxu0 0.0
        %865 = vmatpush.msra.mxu0 %v840
        %866 = vmatpush.msra.mxu0 %v837
        %867 = vmatmul.f32.gmra.mxu0 %v846
        %v868 = vpop.f32.mrf.mxu0
        %v869 = vadd.f32 0.0, %v868
        %870 = vmatmul.f32.gmra.mxu0 %v849
        %v871 = vpop.f32.mrf.mxu0
        %v872 = vadd.f32 0.0, %v871
        %873 = vdwg.mxu0
        %v874 = vadd.f32 %v789, %v869
        %v875 = vadd.f32 %v790, %v872
        %s876 = sld [smem:[#allocation2]]
        %v877 = vstv %s876
        %v878 = vadd.f32 %v874, %v877
        %v879 = vadd.f32 %v875, %v877
        %v880 = vxor.u32 %v878, 2147483648
        %v881 = vxor.u32 %v879, 2147483648
        %v882 = vmul.f32 %v880, 1.442695
        %v883 = vpow.pop %v882
        %v884 = vmul.f32 %v881, 1.442695
        %v885 = vpow.pop %v884
        %v886 = vadd.f32 %v883, 1.0
        %v887 = vadd.f32 %v885, 1.0
        %v888 = vrcp.pop %v886
        %v889 = vmul.f32 %v886, %v888
        %v890 = vsub.f32 1.0, %v889
        %v891 = vmul.f32 %v888, %v890
        %v892 = vadd.f32 %v888, %v891
        %vm893 = vweird.f32 %v886
        %vm894 = vweird.f32 %v888
        %vm895 = vmor %vm893, %vm894
        %v896 = vsel %vm895, %v888, %v892
        %v897 = vand.u32 2147483647, %v886
        %vm898 = vcmp.eq.f32.partialorder %v897, 8.507059e+37
        %v899 = vand.u32 %v886, 2147483648
        %v900 = vor.u32 1.1754944e-38, %v899
        %v901 = vsel %vm898, %v900, %v896
        %v902 = vmul.f32 1.0, %v901
        %v903 = vrcp.pop %v887
        %v904 = vmul.f32 %v887, %v903
        %v905 = vsub.f32 1.0, %v904
        %v906 = vmul.f32 %v903, %v905
        %v907 = vadd.f32 %v903, %v906
        %vm908 = vweird.f32 %v887
        %vm909 = vweird.f32 %v903
        %vm910 = vmor %vm908, %vm909
        %v911 = vsel %vm910, %v903, %v907
        %v912 = vand.u32 2147483647, %v887
        %vm913 = vcmp.eq.f32.partialorder %v912, 8.507059e+37
        %v914 = vand.u32 %v887, 2147483648
        %v915 = vor.u32 1.1754944e-38, %v914
        %v916 = vsel %vm913, %v915, %v911
        %v917 = vmul.f32 1.0, %v916
        %v918 = vmul.f32 %v236, %v902
        %v919 = vmul.f32 %v237, %v917
        %v920 = vmul.f32 %v238, %v902
        %v921 = vmul.f32 %v239, %v917
        %v922 = vmul.f32 %v240, %v902
        %v923 = vmul.f32 %v241, %v917
        %v924 = vmul.f32 %v242, %v902
        %v925 = vmul.f32 %v243, %v917
        %926 = vst.msk [vmem:[%s235] sm:$0xff] %vm244, %v918
        %927 = vst.msk [vmem:[%s235 + $0x8] sm:$0xff] %vm244, %v919
        %928 = vst.msk [vmem:[%s235 + $0x10] sm:$0xff] %vm244, %v920
        %929 = vst.msk [vmem:[%s235 + $0x18] sm:$0xff] %vm244, %v921
        %930 = vst.msk [vmem:[%s235 + $0x20] sm:$0xff] %vm244, %v922
        %931 = vst.msk [vmem:[%s235 + $0x28] sm:$0xff] %vm244, %v923
        %932 = vst.msk [vmem:[%s235 + $0x30] sm:$0xff] %vm244, %v924
        %933 = vst.msk [vmem:[%s235 + $0x38] sm:$0xff] %vm244, %v925
        %s934 = sand.u32 %s120, 1
        %s935 = scalar_lea.sflag [#allocation5], %s934
        %s936 = sand.u32 %s120, 1
        %s937 = smul.addr %s936, 64
        %s938 = scalar_lea.vmem [#allocation8], %s937
        // Predicated region
        $region45: #{tpu_custom_call.1} parent=35 // pred_check
          %p939 = pneg %p130
        $region46: #{tpu_custom_call.1} parent=35 // pred_check_branch
          %941 = sbr.rel (%p939) target = $region48
        $region47: #{tpu_custom_call.1} parent=35 // pred_region
          %943 = vsyncadd %s935, 0
          %s944 = smul.addr %s23, 8
          %s945 = smul.addr %s944, 8
          %s946 = scalar_lea.hbm %s4, %s945
          %s947 = sshll.u32 %s938, 4
          %s948 = int_to_ptr.vmem [resolvable:$true] %s947
          %s949 = sshll.u32 %s946, 4
          %s950 = int_to_ptr.hbm [resolvable:$true] %s949
          %955 = dma.vmem_to_hbm [thread:$0]  %s948, 1024, %s950, %s935, 128, 128, 8
        $region48: #{tpu_custom_call.1} parent=35 // pred_fallthru
          _
      $region36: #{tpu_custom_call.1} parent=5 // pred_fallthru
        _
      %p956 = scmp.le.s32.totalorder 2, %s18
      // Predicated region
      $region49: #{tpu_custom_call.1} parent=5 // pred_check
        %p957 = pneg %p956
      $region50: #{tpu_custom_call.1} parent=5 // pred_check_branch
        %959 = sbr.rel (%p957) target = $region52
      $region51: #{tpu_custom_call.1} parent=5 // pred_region
        %s960 = ssub.s32 %s18, 2
        // Predicated region
        $region53: #{tpu_custom_call.1} parent=51 // pred_check
          %p961 = pneg %p136
        $region54: #{tpu_custom_call.1} parent=51 // pred_check_branch
          %963 = sbr.rel (%p961) target = $region56
        $region55: #{tpu_custom_call.1} parent=51 // pred_region
          %s964 = sand.u32 %s121, 1
          %s965 = scalar_lea.sflag [#allocation5], %s964
          %s966 = sand.u32 %s121, 1
          %s967 = smul.addr %s966, 64
          %s968 = scalar_lea.vmem [#allocation8], %s967
          %970 = dma.done %s965, 1024
        $region56: #{tpu_custom_call.1} parent=51 // pred_fallthru
          _
      $region52: #{tpu_custom_call.1} parent=5 // pred_fallthru
        _
    $region6: #{tpu_custom_call.1} parent=1 // loop_footer
      %s22 = sadd.s32 1, %s18
    $region7: #{tpu_custom_call.1} parent=1 // loop_footer_branch
      %17 = sbr.rel target = $region3
    $region8: #{tpu_custom_call.1} parent=1 // loop_exit
      _
    %971 = vsyncpa [#allocation4], 1
    %s972 = scalar_lea.sflag [#allocation4], 1
    %973 = vsyncpa %s972, 1
    %974 = vsyncpa [#allocation7], 1
    %s975 = scalar_lea.sflag [#allocation7], 1
    %976 = vsyncpa %s975, 1
    %977 = vsyncpa [#allocation5], 1
    %s978 = scalar_lea.sflag [#allocation5], 1
    %979 = vsyncpa %s978, 1

</llo_original>
